<compile_context>
chip_gen: v7x
topology: tpu7x:2x2x1
jax: 0.10.0
libtpu: 0.0.40
codegen_flags: <defaults>
</compile_context>

<pallas_src>
import functools

import jax
import jax.numpy as jnp
from jax.experimental import pallas as pl
from jax.experimental.pallas import tpu as pltpu

_LANES = 128
_MAX_BLOCK_ROWS = 4096          # 4096 x 128 f32 = 2 MiB per input block
_VMEM_LIMIT_BYTES = 32 << 20    # raise v5e's 16 MiB default; default on v6e/v7x


def _round_up(x, m):
    return -(-x // m) * m


def _loss_kernel(x_ref, t_ref, l1_ref, pr_ref, *, rows, block_rows):
    i = pl.program_id(0)

    @pl.when(i == 0)
    def _():
        l1_ref[...] = jnp.zeros_like(l1_ref)
        pr_ref[...] = jnp.zeros_like(pr_ref)

    groups = block_rows // 8
    row0 = i * block_rows

    def _accumulate(x, t):
        # (block_rows, 128) -> (8, 128) partials: tile-aligned reshape + vreg adds
        # (pure VPU, no XLU); the final cross-lane collapse is done in the wrapper.
        l1_ref[...] += jnp.abs(x - t).reshape(groups, 8, _LANES).sum(axis=0)
        pr_ref[...] += jnp.abs(x).reshape(groups, 8, _LANES).sum(axis=0)

    is_full = row0 + block_rows <= rows

    @pl.when(is_full)
    def _():
        # Hot path: all interior blocks -> no iota, no mask, just stream + add.
        _accumulate(x_ref[...].astype(jnp.float32), t_ref[...].astype(jnp.float32))

    @pl.when(jnp.logical_not(is_full))
    def _():
        # Cold path: at most one ragged/overhanging block per call. Rows past
        # `rows` contain unspecified DMA'd data; a select (not multiply) keeps
        # NaN/Inf from leaking and zeros are exact for |.| sums.
        row_ids = row0 + jax.lax.broadcasted_iota(jnp.int32, (block_rows, 1), 0)
        valid = row_ids < rows
        x = jnp.where(valid, x_ref[...].astype(jnp.float32), 0.0)
        t = jnp.where(valid, t_ref[...].astype(jnp.float32), 0.0)
        _accumulate(x, t)


def custom_loss(inp, target, loss_weight=1.0, prior_weight=1.0):
    """loss_weight * mean(|inp - target|) + prior_weight * mean(|inp|)."""
    assert inp.shape == target.shape
    n = inp.size
    x = inp.reshape(-1)
    t = target.reshape(-1)

    rows = n // _LANES
    main = rows * _LANES
    rem = n - main

    l1_sum = jnp.zeros((), jnp.float32)
    pr_sum = jnp.zeros((), jnp.float32)

    if rows > 0:
        # No jnp.pad: the (rows, 128) view is a pure reshape when n % 128 == 0.
        x2d = (x if rem == 0 else x[:main]).reshape(rows, _LANES)
        t2d = (t if rem == 0 else t[:main]).reshape(rows, _LANES)

        block_rows = min(_MAX_BLOCK_ROWS, _round_up(rows, 16))  # 16 keeps bf16 tiling legal
        total_blocks = pl.cdiv(rows, block_rows)

        kernel = functools.partial(_loss_kernel, rows=rows, block_rows=block_rows)

        l1_acc, pr_acc = pl.pallas_call(
            kernel,
            out_shape=(
                jax.ShapeDtypeStruct((8, _LANES), jnp.float32),
                jax.ShapeDtypeStruct((8, _LANES), jnp.float32),
            ),
            grid_spec=pltpu.PrefetchScalarGridSpec(
                num_scalar_prefetch=0,
                grid=(total_blocks,),
                in_specs=[
                    pl.BlockSpec((block_rows, _LANES), lambda i: (i, 0)),
                    pl.BlockSpec((block_rows, _LANES), lambda i: (i, 0)),
                ],
                out_specs=[
                    pl.BlockSpec((8, _LANES), lambda i: (0, 0)),
                    pl.BlockSpec((8, _LANES), lambda i: (0, 0)),
                ],
            ),
            compiler_params=pltpu.CompilerParams(
                dimension_semantics=("arbitrary",),   # reduction axis: outputs resident
                vmem_limit_bytes=_VMEM_LIMIT_BYTES,
            ),
        )(x2d, t2d)

        l1_sum = jnp.sum(l1_acc)
        pr_sum = jnp.sum(pr_acc)

    if rem:
        # Ragged tail (< 128 elements): summed in plain JAX, exact and negligible.
        # TODO(synk): the prefix slice above may cost one copy for ragged n; a
        # manual-DMA path with an element-indexed lane mask would avoid it.
        xt = x[main:].astype(jnp.float32)
        tt = t[main:].astype(jnp.float32)
        l1_sum = l1_sum + jnp.sum(jnp.abs(xt - tt))
        pr_sum = pr_sum + jnp.sum(jnp.abs(xt))

    inv_n = 1.0 / float(n)
    l1_mean = l1_sum * inv_n      # == nn.L1Loss()(input, target)
    prior_mean = pr_sum * inv_n   # == torch.mean(torch.abs(input))
    return loss_weight * l1_mean + prior_weight * prior_mean


if __name__ == "__main__":
    key = jax.random.PRNGKey(0)
    k1, k2 = jax.random.split(key)
    # small NCHW shapes consistent with an image-restoration loss
    x = jax.random.normal(k1, (2, 4, 16, 16), dtype=jnp.float32)
    t = jax.random.normal(k2, (2, 4, 16, 16), dtype=jnp.float32)

    out = custom_loss(x, t, loss_weight=1.0, prior_weight=1.0)
    out = jax.block_until_ready(out)

    # reference check in plain JAX
    ref = jnp.mean(jnp.abs(x - t)) + jnp.mean(jnp.abs(x))
    assert jnp.allclose(out, ref, rtol=1e-5, atol=1e-6), (out, ref)
    print("KERNEL_OK")
</pallas_src>

<mosaic_0001>
module attributes {stable_mosaic.version = 11 : i64} {
  func.func @_loss_kernel(%arg0: i32, %arg1: memref<16x128xf32, #tpu.memory_space<vmem>>, %arg2: memref<16x128xf32, #tpu.memory_space<vmem>>, %arg3: memref<8x128xf32, #tpu.memory_space<vmem>>, %arg4: memref<8x128xf32, #tpu.memory_space<vmem>>) attributes {dimension_semantics = [#tpu.dimension_semantics<arbitrary>], iteration_bounds = array<i64: 1>, scalar_prefetch = 0 : i64, scratch_operands = 0 : i64, tpu.core_type = #tpu.core_type<tc>, window_params = [{transform_indices = @transform_0, window_bounds = array<i64: 16, 128>}, {transform_indices = @transform_1, window_bounds = array<i64: 16, 128>}, {pipeline_mode = #tpu.pipeline_mode<synchronous>, transform_indices = @transform_2, window_bounds = array<i64: 8, 128>}, {pipeline_mode = #tpu.pipeline_mode<synchronous>, transform_indices = @transform_3, window_bounds = array<i64: 8, 128>}]} {
    %c0_i32 = arith.constant 0 : i32
    %0 = arith.cmpi eq, %arg0, %c0_i32 : i32
    %1 = arith.extui %0 : i1 to i32
    %c0_i32_0 = arith.constant 0 : i32
    %2 = arith.cmpi ne, %1, %c0_i32_0 : i32
    scf.if %2 {
      %cst = arith.constant 0.000000e+00 : f32
      %11 = vector.broadcast %cst : f32 to vector<8x128xf32>
      %c0 = arith.constant 0 : index
      %c0_5 = arith.constant 0 : index
      %12 = vector.load %arg3[%c0, %c0_5] : memref<8x128xf32, #tpu.memory_space<vmem>>, vector<8x128xf32>
      tpu.vector_store %arg3[%c0, %c0_5], %11 {strides = array<i32>} : memref<8x128xf32, #tpu.memory_space<vmem>>, vector<8x128xf32>,
      %cst_6 = arith.constant 0.000000e+00 : f32
      %13 = vector.broadcast %cst_6 : f32 to vector<8x128xf32>
      %c0_7 = arith.constant 0 : index
      %c0_8 = arith.constant 0 : index
      %14 = vector.load %arg4[%c0_7, %c0_8] : memref<8x128xf32, #tpu.memory_space<vmem>>, vector<8x128xf32>
      tpu.vector_store %arg4[%c0_7, %c0_8], %13 {strides = array<i32>} : memref<8x128xf32, #tpu.memory_space<vmem>>, vector<8x128xf32>,
    } else {
    }
    %c16_i32 = arith.constant 16 : i32
    %3 = arith.muli %arg0, %c16_i32 : i32
    %c16_i32_1 = arith.constant 16 : i32
    %4 = arith.addi %3, %c16_i32_1 : i32
    %c16_i32_2 = arith.constant 16 : i32
    %5 = arith.cmpi sle, %4, %c16_i32_2 : i32
    %6 = arith.extui %5 : i1 to i32
    %c0_i32_3 = arith.constant 0 : i32
    %7 = arith.cmpi ne, %6, %c0_i32_3 : i32
    scf.if %7 {
      %c0 = arith.constant 0 : index
      %c0_5 = arith.constant 0 : index
      %11 = vector.load %arg1[%c0, %c0_5] : memref<16x128xf32, #tpu.memory_space<vmem>>, vector<16x128xf32>
      %c0_6 = arith.constant 0 : index
      %c0_7 = arith.constant 0 : index
      %12 = vector.load %arg2[%c0_6, %c0_7] : memref<16x128xf32, #tpu.memory_space<vmem>>, vector<16x128xf32>
      %c0_8 = arith.constant 0 : index
      %c0_9 = arith.constant 0 : index
      %13 = vector.load %arg3[%c0_8, %c0_9] : memref<8x128xf32, #tpu.memory_space<vmem>>, vector<8x128xf32>
      %14 = arith.subf %11, %12 : vector<16x128xf32>
      %15 = math.absf %14 : vector<16x128xf32>
      %16 = vector.shape_cast %15 : vector<16x128xf32> to vector<2x8x128xf32>
      %cst = arith.constant dense<0.000000e+00> : vector<8x128xf32>
      %17 = vector.multi_reduction <add>, %16, %cst [0] : vector<2x8x128xf32> to vector<8x128xf32>
      %18 = arith.addf %13, %17 : vector<8x128xf32>
      %c0_10 = arith.constant 0 : index
      %c0_11 = arith.constant 0 : index
      %19 = vector.load %arg3[%c0_10, %c0_11] : memref<8x128xf32, #tpu.memory_space<vmem>>, vector<8x128xf32>
      tpu.vector_store %arg3[%c0_10, %c0_11], %18 {strides = array<i32>} : memref<8x128xf32, #tpu.memory_space<vmem>>, vector<8x128xf32>,
      %c0_12 = arith.constant 0 : index
      %c0_13 = arith.constant 0 : index
      %20 = vector.load %arg4[%c0_12, %c0_13] : memref<8x128xf32, #tpu.memory_space<vmem>>, vector<8x128xf32>
      %21 = math.absf %11 : vector<16x128xf32>
      %22 = vector.shape_cast %21 : vector<16x128xf32> to vector<2x8x128xf32>
      %cst_14 = arith.constant dense<0.000000e+00> : vector<8x128xf32>
      %23 = vector.multi_reduction <add>, %22, %cst_14 [0] : vector<2x8x128xf32> to vector<8x128xf32>
      %24 = arith.addf %20, %23 : vector<8x128xf32>
      %c0_15 = arith.constant 0 : index
      %c0_16 = arith.constant 0 : index
      %25 = vector.load %arg4[%c0_15, %c0_16] : memref<8x128xf32, #tpu.memory_space<vmem>>, vector<8x128xf32>
      tpu.vector_store %arg4[%c0_15, %c0_16], %24 {strides = array<i32>} : memref<8x128xf32, #tpu.memory_space<vmem>>, vector<8x128xf32>,
    } else {
    }
    %true = arith.constant true
    %8 = arith.xori %5, %true : i1
    %9 = arith.extui %8 : i1 to i32
    %c0_i32_4 = arith.constant 0 : i32
    %10 = arith.cmpi ne, %9, %c0_i32_4 : i32
    scf.if %10 {
      %11 = tpu.iota {dimensions = array<i32: 0>} : vector<16x1xi32>
      %12 = vector.broadcast %3 : i32 to vector<16x1xi32>
      %13 = arith.addi %12, %11 : vector<16x1xi32>
      %c16_i32_5 = arith.constant 16 : i32
      %14 = vector.broadcast %c16_i32_5 : i32 to vector<16x1xi32>
      %15 = arith.cmpi slt, %13, %14 : vector<16x1xi32>
      %c0 = arith.constant 0 : index
      %c0_6 = arith.constant 0 : index
      %16 = vector.load %arg1[%c0, %c0_6] : memref<16x128xf32, #tpu.memory_space<vmem>>, vector<16x128xf32>
      %cst = arith.constant 0.000000e+00 : f32
      %17 = vector.shape_cast %15 : vector<16x1xi1> to vector<16x1xi1>
      %18 = vector.broadcast %17 : vector<16x1xi1> to vector<16x128xi1>
      %19 = vector.broadcast %cst : f32 to vector<16x128xf32>
      %20 = arith.select %18, %16, %19 : vector<16x128xi1>, vector<16x128xf32>
      %c0_7 = arith.constant 0 : index
      %c0_8 = arith.constant 0 : index
      %21 = vector.load %arg2[%c0_7, %c0_8] : memref<16x128xf32, #tpu.memory_space<vmem>>, vector<16x128xf32>
      %cst_9 = arith.constant 0.000000e+00 : f32
      %22 = vector.shape_cast %15 : vector<16x1xi1> to vector<16x1xi1>
      %23 = vector.broadcast %22 : vector<16x1xi1> to vector<16x128xi1>
      %24 = vector.broadcast %cst_9 : f32 to vector<16x128xf32>
      %25 = arith.select %23, %21, %24 : vector<16x128xi1>, vector<16x128xf32>
      %c0_10 = arith.constant 0 : index
      %c0_11 = arith.constant 0 : index
      %26 = vector.load %arg3[%c0_10, %c0_11] : memref<8x128xf32, #tpu.memory_space<vmem>>, vector<8x128xf32>
      %27 = arith.subf %20, %25 : vector<16x128xf32>
      %28 = math.absf %27 : vector<16x128xf32>
      %29 = vector.shape_cast %28 : vector<16x128xf32> to vector<2x8x128xf32>
      %cst_12 = arith.constant dense<0.000000e+00> : vector<8x128xf32>
      %30 = vector.multi_reduction <add>, %29, %cst_12 [0] : vector<2x8x128xf32> to vector<8x128xf32>
      %31 = arith.addf %26, %30 : vector<8x128xf32>
      %c0_13 = arith.constant 0 : index
      %c0_14 = arith.constant 0 : index
      %32 = vector.load %arg3[%c0_13, %c0_14] : memref<8x128xf32, #tpu.memory_space<vmem>>, vector<8x128xf32>
      tpu.vector_store %arg3[%c0_13, %c0_14], %31 {strides = array<i32>} : memref<8x128xf32, #tpu.memory_space<vmem>>, vector<8x128xf32>,
      %c0_15 = arith.constant 0 : index
      %c0_16 = arith.constant 0 : index
      %33 = vector.load %arg4[%c0_15, %c0_16] : memref<8x128xf32, #tpu.memory_space<vmem>>, vector<8x128xf32>
      %34 = math.absf %20 : vector<16x128xf32>
      %35 = vector.shape_cast %34 : vector<16x128xf32> to vector<2x8x128xf32>
      %cst_17 = arith.constant dense<0.000000e+00> : vector<8x128xf32>
      %36 = vector.multi_reduction <add>, %35, %cst_17 [0] : vector<2x8x128xf32> to vector<8x128xf32>
      %37 = arith.addf %33, %36 : vector<8x128xf32>
      %c0_18 = arith.constant 0 : index
      %c0_19 = arith.constant 0 : index
      %38 = vector.load %arg4[%c0_18, %c0_19] : memref<8x128xf32, #tpu.memory_space<vmem>>, vector<8x128xf32>
      tpu.vector_store %arg4[%c0_18, %c0_19], %37 {strides = array<i32>} : memref<8x128xf32, #tpu.memory_space<vmem>>, vector<8x128xf32>,
    } else {
    }
    return
  }
  func.func @transform_0(%arg0: i32) -> (i32, i32) {
    %c0_i32 = arith.constant 0 : i32
    %c0_i32_0 = arith.constant 0 : i32
    return %arg0, %c0_i32 : i32, i32
  }
  func.func @transform_1(%arg0: i32) -> (i32, i32) {
    %c0_i32 = arith.constant 0 : i32
    %c0_i32_0 = arith.constant 0 : i32
    return %arg0, %c0_i32 : i32, i32
  }
  func.func @transform_2(%arg0: i32) -> (i32, i32) {
    %c0_i32 = arith.constant 0 : i32
    %c0_i32_0 = arith.constant 0 : i32
    %c0_i32_1 = arith.constant 0 : i32
    return %c0_i32, %c0_i32_0 : i32, i32
  }
  func.func @transform_3(%arg0: i32) -> (i32, i32) {
    %c0_i32 = arith.constant 0 : i32
    %c0_i32_0 = arith.constant 0 : i32
    %c0_i32_1 = arith.constant 0 : i32
    return %c0_i32, %c0_i32_0 : i32, i32
  }
}

</mosaic_0001>

<llo_original>
// kernel: tpu_custom_call.1
$region0: #{tpu_custom_call.1}
  #allocation0 [shape = 'u32[]', space=smem, size = 0x4, offset = 0x4, fixed_abs, tag = 'smem constant byte address 0x4 - core index']
  #allocation1 [shape = 'u32[144,128]{1,0:T(1,128)}', space=vmem, size = 0x12000, scoped, tag = 'internal scratch']
  %s0 = inlined_call_operand.hbm [shape: f32[16,128], index: 0, kind: input, shape index: {}]
  %s1 = inlined_call_operand.hbm [shape: f32[16,128], index: 1, kind: input, shape index: {}]
  %s2 = inlined_call_operand.hbm [shape: f32[8,128], index: 2, kind: output, shape index: {0}]
  %s3 = inlined_call_operand.hbm [shape: f32[8,128], index: 3, kind: output, shape index: {1}]
  %4 = xla_tuple %s2, %s3
  %s5 = sld [smem:[#allocation0]]
  $region46: #{tpu_custom_call.1} parent=0
    _
  %s7 = ssub.s32 1, %s5
  %s8 = scalar_select 0, %s7, %s5
  $region1: #{tpu_custom_call.1} parent=0
    #allocation2 [shape = 'u8[8192]{0}', space=vmem, size = 0x2000, scoped, tag = 'input window, operand 0, single buffered']
    #allocation3 [shape = 's32[1]{0}', space=sflag, size = 0x4, scoped, tag = 'scoped memory for tpu_custom_call.1']
    #allocation4 [shape = 's32[1]{0}', space=sflag, size = 0x4, scoped, tag = 'scoped memory for tpu_custom_call.1']
    #allocation5 [shape = 'u8[8192]{0}', space=vmem, size = 0x2000, scoped, tag = 'input window, operand 1, single buffered']
    #allocation6 [shape = 's32[1]{0}', space=sflag, size = 0x4, scoped, tag = 'scoped memory for tpu_custom_call.1']
    #allocation7 [shape = 'u8[4096]{0}', space=vmem, size = 0x1000, scoped, tag = 'output window, operand 0, single buffered']
    #allocation8 [shape = 'u8[4096]{0}', space=vmem, size = 0x1000, scoped, tag = 'output window, operand 1, single buffered']
    #allocation9 [shape = 's32[1]{0}', space=sflag, size = 0x4, scoped, tag = 'scoped memory for tpu_custom_call.1']
    %9 = vsyncpa [#allocation3], 0
    %10 = vsyncpa [#allocation6], 0
    %11 = vsyncpa [#allocation4], 0
    %12 = vsyncpa [#allocation9], 0
    // Predicated region
    $region2: #{tpu_custom_call.1} parent=1 // pred_check
      _
    $region3: #{tpu_custom_call.1} parent=1 // pred_check_branch
      %14 = sbr.rel (0) target = $region5
    $region4: #{tpu_custom_call.1} parent=1 // pred_region
      %s16 = ssub.s32 256, 256
      %17 = vsyncadd [#allocation3], %s16
      %s18 = sshll.u32 [#allocation2], 4
      %s19 = int_to_ptr.vmem [resolvable:$true] %s18
      %24 = dma.hbm_to_vmem [thread:$0]  %s0, 256, %s19, [#allocation3], 128, 128, 8
    $region5: #{tpu_custom_call.1} parent=1 // pred_fallthru
      _
    // Predicated region
    $region6: #{tpu_custom_call.1} parent=1 // pred_check
      _
    $region7: #{tpu_custom_call.1} parent=1 // pred_check_branch
      %26 = sbr.rel (0) target = $region9
    $region8: #{tpu_custom_call.1} parent=1 // pred_region
      %s28 = ssub.s32 256, 256
      %29 = vsyncadd [#allocation6], %s28
      %s30 = sshll.u32 [#allocation5], 4
      %s31 = int_to_ptr.vmem [resolvable:$true] %s30
      %36 = dma.hbm_to_vmem [thread:$0]  %s1, 256, %s31, [#allocation6], 128, 128, 8
    $region9: #{tpu_custom_call.1} parent=1 // pred_fallthru
      _
    // Predicated region
    $region10: #{tpu_custom_call.1} parent=1 // pred_check
      _
    $region11: #{tpu_custom_call.1} parent=1 // pred_check_branch
      %38 = sbr.rel (0) target = $region13
    $region12: #{tpu_custom_call.1} parent=1 // pred_region
      %39 = dma.done [#allocation3], 256
    $region13: #{tpu_custom_call.1} parent=1 // pred_fallthru
      _
    // Predicated region
    $region14: #{tpu_custom_call.1} parent=1 // pred_check
      _
    $region15: #{tpu_custom_call.1} parent=1 // pred_check_branch
      %41 = sbr.rel (0) target = $region17
    $region16: #{tpu_custom_call.1} parent=1 // pred_region
      %42 = dma.done [#allocation6], 256
    $region17: #{tpu_custom_call.1} parent=1 // pred_fallthru
      _
    %p43 = scmp.eq.s32.totalorder 0, 0
    // Predicated region
    $region18: #{tpu_custom_call.1} parent=1 // pred_check
      %p44 = pneg %p43
    $region19: #{tpu_custom_call.1} parent=1 // pred_check_branch
      %46 = sbr.rel (%p44) target = $region21
    $region20: #{tpu_custom_call.1} parent=1 // pred_region
      %47 = vst [vmem:[#allocation7] sm:$0xff] 0.0
      %48 = vst [vmem:[#allocation8] sm:$0xff] 0.0
    $region21: #{tpu_custom_call.1} parent=1 // pred_fallthru
      _
    %s49 = smul.u32 0, 16
    %s50 = sadd.s32 %s49, 16
    %p51 = scmp.le.s32.totalorder %s50, 16
    // Predicated region
    $region22: #{tpu_custom_call.1} parent=1 // pred_check
      %p52 = pneg %p51
    $region23: #{tpu_custom_call.1} parent=1 // pred_check_branch
      %54 = sbr.rel (%p52) target = $region25
    $region24: #{tpu_custom_call.1} parent=1 // pred_region
      %v55 = vld [vmem:[#allocation2] sm:$0xff]
      %v56 = vld [vmem:[#allocation2 + $0x8] sm:$0xff]
      %v57 = vld [vmem:[#allocation5] sm:$0xff]
      %v58 = vld [vmem:[#allocation5 + $0x8] sm:$0xff]
      %v59 = vld [vmem:[#allocation7] sm:$0xff]
      %v60 = vsub.f32 %v55, %v57
      %v61 = vsub.f32 %v56, %v58
      %v62 = vand.u32 2147483647, %v60
      %v63 = vand.u32 2147483647, %v61
      %v64 = vadd.f32 %v62, %v63
      %v65 = vadd.f32 %v59, %v64
      %66 = vst [vmem:[#allocation7] sm:$0xff] %v65
      %v67 = vld [vmem:[#allocation8] sm:$0xff]
      %v68 = vand.u32 2147483647, %v55
      %v69 = vand.u32 2147483647, %v56
      %v70 = vadd.f32 %v68, %v69
      %v71 = vadd.f32 %v67, %v70
      %72 = vst [vmem:[#allocation8] sm:$0xff] %v71
    $region25: #{tpu_custom_call.1} parent=1 // pred_fallthru
      _
    %p73 = scmp.gt.s32.totalorder %s50, 16
    // Predicated region
    $region26: #{tpu_custom_call.1} parent=1 // pred_check
      %p74 = pneg %p73
    $region27: #{tpu_custom_call.1} parent=1 // pred_check_branch
      %76 = sbr.rel (%p74) target = $region29
    $region28: #{tpu_custom_call.1} parent=1 // pred_region
      %v77 = vlaneseq
      %v78 = vshrl.u32 %v77, 7
      %v79 = vadd.s32 %v78, 8
      %v80 = vstv %s49
      %v81 = vadd.s32 %v80, %v78
      %v82 = vadd.s32 %v80, %v79
      %vm83 = vcmp.lt.s32.totalorder %v81, 16
      %vm84 = vcmp.lt.s32.totalorder %v82, 16
      %v85 = vld [vmem:[#allocation2] sm:$0xff]
      %v86 = vld [vmem:[#allocation2 + $0x8] sm:$0xff]
      %v87 = vsel %vm83, 1, 0
      %v88 = vsel %vm84, 1, 0
      %vm89 = vcmp.eq.s32.totalorder %v87, 1
      %vm90 = vcmp.eq.s32.totalorder %v88, 1
      %v91 = vsel %vm89, %v85, 0.0
      %v92 = vsel %vm90, %v86, 0.0
      %v93 = vld [vmem:[#allocation5] sm:$0xff]
      %v94 = vld [vmem:[#allocation5 + $0x8] sm:$0xff]
      %v95 = vsel %vm89, %v93, 0.0
      %v96 = vsel %vm90, %v94, 0.0
      %v97 = vld [vmem:[#allocation7] sm:$0xff]
      %v98 = vsub.f32 %v91, %v95
      %v99 = vsub.f32 %v92, %v96
      %v100 = vand.u32 2147483647, %v98
      %v101 = vand.u32 2147483647, %v99
      %v102 = vadd.f32 %v100, %v101
      %v103 = vadd.f32 %v97, %v102
      %104 = vst [vmem:[#allocation7] sm:$0xff] %v103
      %v105 = vld [vmem:[#allocation8] sm:$0xff]
      %v106 = vand.u32 2147483647, %v91
      %v107 = vand.u32 2147483647, %v92
      %v108 = vadd.f32 %v106, %v107
      %v109 = vadd.f32 %v105, %v108
      %110 = vst [vmem:[#allocation8] sm:$0xff] %v109
    $region29: #{tpu_custom_call.1} parent=1 // pred_fallthru
      _
    // Predicated region
    $region30: #{tpu_custom_call.1} parent=1 // pred_check
      _
    $region31: #{tpu_custom_call.1} parent=1 // pred_check_branch
      %112 = sbr.rel (0) target = $region33
    $region32: #{tpu_custom_call.1} parent=1 // pred_region
      %s114 = ssub.s32 128, 128
      %115 = vsyncadd [#allocation4], %s114
      %s117 = sshll.u32 [#allocation7], 4
      %s118 = int_to_ptr.vmem [resolvable:$true] %s117
      %120 = dma.vmem_to_hbm [thread:$0]  %s118, 128, %s2, [#allocation4]
    $region33: #{tpu_custom_call.1} parent=1 // pred_fallthru
      _
    // Predicated region
    $region34: #{tpu_custom_call.1} parent=1 // pred_check
      _
    $region35: #{tpu_custom_call.1} parent=1 // pred_check_branch
      %122 = sbr.rel (0) target = $region37
    $region36: #{tpu_custom_call.1} parent=1 // pred_region
      %s124 = ssub.s32 128, 128
      %125 = vsyncadd [#allocation9], %s124
      %s127 = sshll.u32 [#allocation8], 4
      %s128 = int_to_ptr.vmem [resolvable:$true] %s127
      %130 = dma.vmem_to_hbm [thread:$0]  %s128, 128, %s3, [#allocation9]
    $region37: #{tpu_custom_call.1} parent=1 // pred_fallthru
      _
    // Predicated region
    $region38: #{tpu_custom_call.1} parent=1 // pred_check
      _
    $region39: #{tpu_custom_call.1} parent=1 // pred_check_branch
      %132 = sbr.rel (0) target = $region41
    $region40: #{tpu_custom_call.1} parent=1 // pred_region
      %133 = dma.done [#allocation4], 128
    $region41: #{tpu_custom_call.1} parent=1 // pred_fallthru
      _
    // Predicated region
    $region42: #{tpu_custom_call.1} parent=1 // pred_check
      _
    $region43: #{tpu_custom_call.1} parent=1 // pred_check_branch
      %135 = sbr.rel (0) target = $region45
    $region44: #{tpu_custom_call.1} parent=1 // pred_region
      %136 = dma.done [#allocation9], 128
    $region45: #{tpu_custom_call.1} parent=1 // pred_fallthru
      _
    %137 = vsyncpa [#allocation3], 1
    %138 = vsyncpa [#allocation6], 1
    %139 = vsyncpa [#allocation4], 1
    %140 = vsyncpa [#allocation9], 1

</llo_original>
